<compile_context>
chip_gen: v6e
topology: v6e:2x2x1
jax: 0.10.0
libtpu: 0.0.40
codegen_flags: <defaults>
</compile_context>

<pallas_src>
import functools
import math

import jax
import jax.numpy as jnp
from jax import lax
from jax.experimental import pallas as pl
from jax.experimental.pallas import tpu as pltpu


def _sinkhorn_kernel(x_ref, y_ref, cost_ref, pi_ref, c_hbm_ref,
                     c_vmem, c_sem, *,
                     eps: float, max_iter: int, thresh: float,
                     log_mu: float, log_nu: float):
    x = x_ref[...]                               # (B, P1, D) f32
    y = y_ref[...]                               # (B, P2, D) f32
    batch, p1, d = x.shape
    p2 = y.shape[1]
    inv_eps = 1.0 / eps
    inv_b = 1.0 / batch

    # ---- cost matrix C_ij = ||x_i - y_j||^2 via MXU expansion -------------------
    x_sq = jnp.sum(x * x, axis=-1, keepdims=True)                     # (B, P1, 1)
    ones_d = jnp.ones((batch, 1, d), jnp.float32)
    # ||y_j||^2 laid out as a (B, 1, P2) row (P2 stays on lanes, no relayout).
    y_sq = jnp.einsum('bod,bjd->boj', ones_d, y * y,
                      preferred_element_type=jnp.float32)             # (B, 1, P2)
    xy = jnp.einsum('bid,bjd->bij', x, y,
                    preferred_element_type=jnp.float32)               # (B, P1, P2)
    c = x_sq - 2.0 * xy + y_sq                                        # (B, P1, P2)

    # C is final before the loop: stage it and stream the HBM writeback behind the
    # Sinkhorn iterations; the epilogue only waits on the DMA.
    c_vmem[...] = c
    c_copy = pltpu.make_async_copy(c_vmem, c_hbm_ref, c_sem)
    c_copy.start()

    # Loop-invariant ones vectors for the MXU-offloaded row/col sums.
    # (Hoisted: broadcast_in_dim is not CSE'd — do not rebuild per iteration.)
    ones_p2 = jnp.ones((batch, p2, 1), jnp.float32)
    ones_p1 = jnp.ones((batch, 1, p1), jnp.float32)

    def lse_rows(m):
        # Stable logsumexp over the last axis -> (B, P1, 1); sum on the MXU.
        mmax = jnp.max(m, axis=-1, keepdims=True)                     # XLU
        e = jnp.exp(m - mmax)                                         # EUP
        s = jnp.einsum('bij,bjo->bio', e, ones_p2,
                       preferred_element_type=jnp.float32)            # MXU
        return jnp.log(s) + mmax

    def lse_cols(m):
        # Stable logsumexp over axis=-2 -> (B, 1, P2); sum on the MXU.
        mmax = jnp.max(m, axis=-2, keepdims=True)                     # XLU
        e = jnp.exp(m - mmax)                                         # EUP
        s = jnp.einsum('boi,bij->boj', ones_p1, e,
                       preferred_element_type=jnp.float32)            # MXU
        return jnp.log(s) + mmax

    # ---- log-domain Sinkhorn iterations with true early exit --------------------
    u0 = jnp.zeros((batch, p1, 1), jnp.float32)
    v0 = jnp.zeros((batch, 1, p2), jnp.float32)

    def cond(carry):
        i, _, _, err = carry
        return jnp.logical_and(i < max_iter, err >= thresh)

    def body(carry):
        i, u, v, _ = carry
        m1 = (u + v - c) * inv_eps                                    # (B, P1, P2)
        u_new = eps * (log_mu - lse_rows(m1)) + u                     # (B, P1, 1)
        # rank-1 update: M(C, u_new, v) = m1 + (u_new - u)/eps  (no second C read)
        m2 = m1 + (u_new - u) * inv_eps
        v_new = eps * (log_nu - lse_cols(m2)) + v                     # (B, 1, P2)
        # torch break criterion: err = mean_b sum_i |u_new - u|
        e1 = jnp.sum(jnp.abs(u_new - u), axis=1, keepdims=True)       # (B, 1, 1)
        e1 = jnp.sum(e1, axis=0, keepdims=True)                       # (1, 1, 1)
        err = e1[0, 0, 0] * inv_b                                     # scalar f32
        return (i + 1, u_new, v_new, err)

    init = (jnp.array(0, jnp.int32), u0, v0, jnp.array(jnp.inf, jnp.float32))
    _, u, v, _ = lax.while_loop(cond, body, init)

    # ---- transport plan, per-batch cost, outputs ---------------------------------
    pi = jnp.exp((u + v - c) * inv_eps)                               # (B, P1, P2)
    pi_ref[...] = pi.astype(pi_ref.dtype)
    pc = jnp.einsum('bij,bjo->bio', pi * c, ones_p2,
                    preferred_element_type=jnp.float32)               # (B, P1, 1)
    cost_ref[...] = jnp.sum(pc, axis=1, keepdims=True).astype(cost_ref.dtype)
    c_copy.wait()


def sinkhorn_distance(x, y, *, eps, max_iter, reduction='none'):
    """Pallas wrapper reproducing SinkhornDistance(eps, max_iter, reduction)(x, y)."""
    squeeze = (x.ndim == 2)
    if squeeze:
        x, y = x[None], y[None]
    x = x.astype(jnp.float32)
    y = y.astype(jnp.float32)
    b, p1, d = x.shape
    p2 = y.shape[1]

    kernel = functools.partial(
        _sinkhorn_kernel,
        eps=float(eps), max_iter=int(max_iter), thresh=0.1,
        log_mu=math.log(1.0 / p1 + 1e-8),
        log_nu=math.log(1.0 / p2 + 1e-8),
    )

    flops = int(2 * b * p1 * p2 * d + (18 * max_iter + 12) * b * p1 * p2)
    transc = int(max_iter * (2 * b * p1 * p2 + b * (p1 + p2)) + b * p1 * p2)
    nbytes = int(4 * (b * p1 * d + b * p2 * d + 2 * b * p1 * p2 + b))

    # Gridless design: everything lives in VMEM.  Raise the scoped-VMEM limit above
    # the low defaults; cap at 64 MiB so the setting is valid on v7x as well.
    vmem_need = 4 * (b * p1 * d + b * p2 * d + 8 * b * p1 * p2) + (1 << 20)
    vmem_limit = int(min(max(vmem_need, 32 << 20), 64 << 20))

    cost3, pi, c = pl.pallas_call(
        kernel,
        out_shape=(
            jax.ShapeDtypeStruct((b, 1, 1), jnp.float32),    # per-batch cost
            jax.ShapeDtypeStruct((b, p1, p2), jnp.float32),  # pi
            jax.ShapeDtypeStruct((b, p1, p2), jnp.float32),  # C
        ),
        in_specs=[
            pl.BlockSpec(memory_space=pltpu.MemorySpace.VMEM),   # x (B,P1,D)
            pl.BlockSpec(memory_space=pltpu.MemorySpace.VMEM),   # y (B,P2,D)
        ],
        out_specs=(
            pl.BlockSpec(memory_space=pltpu.MemorySpace.VMEM),   # cost
            pl.BlockSpec(memory_space=pltpu.MemorySpace.VMEM),   # pi
            pl.BlockSpec(memory_space=pl.ANY),                   # C: manual DMA writeback
        ),
        scratch_shapes=[
            pltpu.VMEM((b, p1, p2), jnp.float32),                # C staging buffer
            pltpu.SemaphoreType.DMA,                             # C writeback semaphore
        ],
        compiler_params=pltpu.CompilerParams(vmem_limit_bytes=vmem_limit),
        cost_estimate=pl.CostEstimate(flops=flops, transcendentals=transc,
                                      bytes_accessed=nbytes),
    )(x, y)

    cost = cost3.reshape(b)
    if squeeze:
        cost, pi, c = cost[0], pi[0], c[0]
    if reduction == 'mean':
        cost = jnp.mean(cost)
    elif reduction == 'sum':
        cost = jnp.sum(cost)
    return cost, pi, c


def _reference(x, y, eps, max_iter, reduction='none'):
    """Pure-JAX mirror of the PyTorch forward (literal broadcast cost, real break)."""
    squeeze = (x.ndim == 2)
    if squeeze:
        x, y = x[None], y[None]
    b, p1, _ = x.shape
    p2 = y.shape[1]
    c = jnp.sum(jnp.abs(x[:, :, None, :] - y[:, None, :, :]) ** 2, axis=-1)
    mu = jnp.full((b, p1), 1.0 / p1, jnp.float32)
    nu = jnp.full((b, p2), 1.0 / p2, jnp.float32)
    u = jnp.zeros_like(mu)
    v = jnp.zeros_like(nu)
    thresh = 0.1

    def M(u, v):
        return (-c + u[:, :, None] + v[:, None, :]) / eps

    def lse(m):
        mmax = jnp.max(m, axis=-1, keepdims=True)
        return jnp.squeeze(mmax, -1) + jnp.log(jnp.sum(jnp.exp(m - mmax), axis=-1))

    for _ in range(max_iter):
        u1 = u
        u = eps * (jnp.log(mu + 1e-8) - lse(M(u, v))) + u
        v = eps * (jnp.log(nu + 1e-8) - lse(jnp.swapaxes(M(u, v), -2, -1))) + v
        err = jnp.mean(jnp.sum(jnp.abs(u - u1), axis=-1))
        if float(err) < thresh:
            break
    pi = jnp.exp(M(u, v))
    cost = jnp.sum(pi * c, axis=(-2, -1))
    if squeeze:
        cost, pi, c = cost[0], pi[0], c[0]
    if reduction == 'mean':
        cost = jnp.mean(cost)
    elif reduction == 'sum':
        cost = jnp.sum(cost)
    return cost, pi, c


if __name__ == "__main__":
    # Small point clouds: batch=2, P1=8 points vs P2=16 points, D=8 features.
    B, P1, P2, D = 2, 8, 16, 8
    EPS, MAX_ITER = 1.0, 100

    key = jax.random.PRNGKey(0)
    kx, ky = jax.random.split(key)
    x = jax.random.normal(kx, (B, P1, D), jnp.float32)
    y = jax.random.normal(ky, (B, P2, D), jnp.float32)

    cost, pi, c = sinkhorn_distance(x, y, eps=EPS, max_iter=MAX_ITER, reduction='none')
    cost, pi, c = jax.block_until_ready((cost, pi, c))

    ref_cost, ref_pi, ref_c = _reference(x, y, EPS, MAX_ITER, reduction='none')

    assert cost.shape == (B,) and pi.shape == (B, P1, P2) and c.shape == (B, P1, P2)
    assert jnp.allclose(c, ref_c, atol=1e-3, rtol=1e-3), "cost-matrix mismatch"
    assert jnp.allclose(pi, ref_pi, atol=1e-3, rtol=1e-3), "transport-plan mismatch"
    assert jnp.allclose(cost, ref_cost, atol=1e-3, rtol=1e-3), "sinkhorn cost mismatch"

    print("KERNEL_OK")
</pallas_src>

<mosaic_0001>
module attributes {stable_mosaic.version = 11 : i64} {
  func.func @_sinkhorn_kernel(%arg0: memref<2x8x8xf32, #tpu.memory_space<vmem>>, %arg1: memref<2x16x8xf32, #tpu.memory_space<vmem>>, %arg2: memref<2x1x1xf32, #tpu.memory_space<vmem>>, %arg3: memref<2x8x16xf32, #tpu.memory_space<vmem>>, %arg4: memref<2x8x16xf32, #tpu.memory_space<any>>, %arg5: memref<2x8x16xf32, #tpu.memory_space<vmem>>, %arg6: memref<!tpu.dma_semaphore, #tpu.memory_space<semaphore_mem>>) attributes {dimension_semantics = [], scalar_prefetch = 0 : i64, scratch_operands = 2 : i64, tpu.core_type = #tpu.core_type<tc>} {
    %c0 = arith.constant 0 : index
    %c0_0 = arith.constant 0 : index
    %c0_1 = arith.constant 0 : index
    %0 = vector.load %arg0[%c0, %c0_0, %c0_1] : memref<2x8x8xf32, #tpu.memory_space<vmem>>, vector<2x8x8xf32>
    %c0_2 = arith.constant 0 : index
    %c0_3 = arith.constant 0 : index
    %c0_4 = arith.constant 0 : index
    %1 = vector.load %arg1[%c0_2, %c0_3, %c0_4] : memref<2x16x8xf32, #tpu.memory_space<vmem>>, vector<2x16x8xf32>
    %2 = arith.mulf %0, %0 : vector<2x8x8xf32>
    %cst = arith.constant dense<0.000000e+00> : vector<2x8xf32>
    %3 = vector.multi_reduction <add>, %2, %cst [2] : vector<2x8x8xf32> to vector<2x8xf32>
    %4 = vector.shape_cast %3 : vector<2x8xf32> to vector<2x8x1xf32>
    %cst_5 = arith.constant 1.000000e+00 : f32
    %5 = vector.broadcast %cst_5 : f32 to vector<2x1x8xf32>
    %6 = arith.mulf %1, %1 : vector<2x16x8xf32>
    "tpu.trace_start"() <{level = 10 : i32, message = "bod,bjd->boj"}> : () -> ()
    %cst_6 = arith.constant dense<0.000000e+00> : vector<2x1x16xf32>
    %7 = tpu.matmul %5, %6, %cst_6 {dimension_numbers = #tpu.dot_dimension_numbers<[2], [2], [1], [1], [0, 0, 0, 1, 1, 1], [0], [0]>} : vector<2x1x8xf32>, vector<2x16x8xf32>, vector<2x1x16xf32> -> vector<2x1x16xf32>
    "tpu.trace_stop"() : () -> ()
    "tpu.trace_start"() <{level = 10 : i32, message = "bid,bjd->bij"}> : () -> ()
    %cst_7 = arith.constant dense<0.000000e+00> : vector<2x8x16xf32>
    %8 = tpu.matmul %0, %1, %cst_7 {dimension_numbers = #tpu.dot_dimension_numbers<[2], [2], [1], [1], [0, 0, 0, 1, 1, 1], [0], [0]>} : vector<2x8x8xf32>, vector<2x16x8xf32>, vector<2x8x16xf32> -> vector<2x8x16xf32>
    "tpu.trace_stop"() : () -> ()
    %cst_8 = arith.constant 2.000000e+00 : f32
    %9 = vector.broadcast %cst_8 : f32 to vector<2x8x16xf32>
    %10 = arith.mulf %9, %8 : vector<2x8x16xf32>
    %11 = vector.broadcast %4 : vector<2x8x1xf32> to vector<2x8x16xf32>
    %12 = arith.subf %11, %10 : vector<2x8x16xf32>
    %13 = vector.broadcast %7 : vector<2x1x16xf32> to vector<2x8x16xf32>
    %14 = arith.addf %12, %13 : vector<2x8x16xf32>
    %c0_9 = arith.constant 0 : index
    %c0_10 = arith.constant 0 : index
    %c0_11 = arith.constant 0 : index
    %15 = vector.load %arg5[%c0_9, %c0_10, %c0_11] : memref<2x8x16xf32, #tpu.memory_space<vmem>>, vector<2x8x16xf32>
    tpu.vector_store %arg5[%c0_9, %c0_10, %c0_11], %14 {strides = array<i32>} : memref<2x8x16xf32, #tpu.memory_space<vmem>>, vector<2x8x16xf32>,
    tpu.enqueue_dma source(%arg5 : memref<2x8x16xf32, #tpu.memory_space<vmem>>) target(%arg4 : memref<2x8x16xf32, #tpu.memory_space<any>>) target_semaphore(%arg6 : memref<!tpu.dma_semaphore, #tpu.memory_space<semaphore_mem>>)
    %cst_12 = arith.constant 1.000000e+00 : f32
    %16 = vector.broadcast %cst_12 : f32 to vector<2x16x1xf32>
    %cst_13 = arith.constant 1.000000e+00 : f32
    %17 = vector.broadcast %cst_13 : f32 to vector<2x1x8xf32>
    %cst_14 = arith.constant 0.000000e+00 : f32
    %18 = vector.broadcast %cst_14 : f32 to vector<2x8x1xf32>
    %cst_15 = arith.constant 0.000000e+00 : f32
    %19 = vector.broadcast %cst_15 : f32 to vector<2x1x16xf32>
    %c0_i32 = arith.constant 0 : i32
    %cst_16 = arith.constant 0x7F800000 : f32
    %20:4 = scf.while (%arg7 = %c0_i32, %arg8 = %18, %arg9 = %19, %arg10 = %cst_16) : (i32, vector<2x8x1xf32>, vector<2x1x16xf32>, f32) -> (i32, vector<2x8x1xf32>, vector<2x1x16xf32>, f32) {
      %c100_i32 = arith.constant 100 : i32
      %34 = arith.cmpi slt, %arg7, %c100_i32 : i32
      %cst_26 = arith.constant 1.000000e-01 : f32
      %35 = arith.cmpf oge, %arg10, %cst_26 : f32
      %36 = arith.andi %34, %35 : i1
      scf.condition(%36) %arg7, %arg8, %arg9, %arg10 : i32, vector<2x8x1xf32>, vector<2x1x16xf32>, f32
    } do {
    ^bb0(%arg7: i32, %arg8: vector<2x8x1xf32>, %arg9: vector<2x1x16xf32>, %arg10: f32):
      %34 = vector.broadcast %arg8 : vector<2x8x1xf32> to vector<2x8x16xf32>
      %35 = vector.broadcast %arg9 : vector<2x1x16xf32> to vector<2x8x16xf32>
      %36 = arith.addf %34, %35 : vector<2x8x16xf32>
      %37 = arith.subf %36, %14 : vector<2x8x16xf32>
      %cst_26 = arith.constant 1.000000e+00 : f32
      %38 = vector.broadcast %cst_26 : f32 to vector<2x8x16xf32>
      %39 = arith.mulf %37, %38 : vector<2x8x16xf32>
      %cst_27 = arith.constant dense<0xFF800000> : vector<2x8xf32>
      %40 = vector.multi_reduction <maximumf>, %39, %cst_27 [2] : vector<2x8x16xf32> to vector<2x8xf32>
      %41 = vector.shape_cast %40 : vector<2x8xf32> to vector<2x8x1xf32>
      %42 = vector.broadcast %41 : vector<2x8x1xf32> to vector<2x8x16xf32>
      %43 = arith.subf %39, %42 : vector<2x8x16xf32>
      %44 = math.exp %43 : vector<2x8x16xf32>
      "tpu.trace_start"() <{level = 10 : i32, message = "bij,bjo->bio"}> : () -> ()
      %cst_28 = arith.constant dense<0.000000e+00> : vector<2x8x1xf32>
      %45 = tpu.matmul %44, %16, %cst_28 {dimension_numbers = #tpu.dot_dimension_numbers<[2], [1], [1], [2], [0, 0, 0, 1, 1, 2], [0], [0]>} : vector<2x8x16xf32>, vector<2x16x1xf32>, vector<2x8x1xf32> -> vector<2x8x1xf32>
      "tpu.trace_stop"() : () -> ()
      %46 = math.log %45 : vector<2x8x1xf32>
      %47 = arith.addf %46, %41 : vector<2x8x1xf32>
      %cst_29 = arith.constant -2.07944155 : f32
      %48 = vector.broadcast %cst_29 : f32 to vector<2x8x1xf32>
      %49 = arith.subf %48, %47 : vector<2x8x1xf32>
      %cst_30 = arith.constant 1.000000e+00 : f32
      %50 = vector.broadcast %cst_30 : f32 to vector<2x8x1xf32>
      %51 = arith.mulf %50, %49 : vector<2x8x1xf32>
      %52 = arith.addf %51, %arg8 : vector<2x8x1xf32>
      %53 = arith.subf %52, %arg8 : vector<2x8x1xf32>
      %cst_31 = arith.constant 1.000000e+00 : f32
      %54 = vector.broadcast %cst_31 : f32 to vector<2x8x1xf32>
      %55 = arith.mulf %53, %54 : vector<2x8x1xf32>
      %56 = vector.broadcast %55 : vector<2x8x1xf32> to vector<2x8x16xf32>
      %57 = arith.addf %39, %56 : vector<2x8x16xf32>
      %cst_32 = arith.constant dense<0xFF800000> : vector<2x16xf32>
      %58 = vector.multi_reduction <maximumf>, %57, %cst_32 [1] : vector<2x8x16xf32> to vector<2x16xf32>
      %59 = vector.shape_cast %58 : vector<2x16xf32> to vector<2x1x16xf32>
      %60 = vector.broadcast %59 : vector<2x1x16xf32> to vector<2x8x16xf32>
      %61 = arith.subf %57, %60 : vector<2x8x16xf32>
      %62 = math.exp %61 : vector<2x8x16xf32>
      "tpu.trace_start"() <{level = 10 : i32, message = "boi,bij->boj"}> : () -> ()
      %cst_33 = arith.constant dense<0.000000e+00> : vector<2x1x16xf32>
      %63 = tpu.matmul %17, %62, %cst_33 {dimension_numbers = #tpu.dot_dimension_numbers<[2], [1], [1], [2], [0, 0, 0, 1, 1, 2], [0], [0]>} : vector<2x1x8xf32>, vector<2x8x16xf32>, vector<2x1x16xf32> -> vector<2x1x16xf32>
      "tpu.trace_stop"() : () -> ()
      %64 = math.log %63 : vector<2x1x16xf32>
      %65 = arith.addf %64, %59 : vector<2x1x16xf32>
      %cst_34 = arith.constant -2.77258849 : f32
      %66 = vector.broadcast %cst_34 : f32 to vector<2x1x16xf32>
      %67 = arith.subf %66, %65 : vector<2x1x16xf32>
      %cst_35 = arith.constant 1.000000e+00 : f32
      %68 = vector.broadcast %cst_35 : f32 to vector<2x1x16xf32>
      %69 = arith.mulf %68, %67 : vector<2x1x16xf32>
      %70 = arith.addf %69, %arg9 : vector<2x1x16xf32>
      %71 = arith.subf %52, %arg8 : vector<2x8x1xf32>
      %72 = math.absf %71 : vector<2x8x1xf32>
      %cst_36 = arith.constant dense<0.000000e+00> : vector<2x1xf32>
      %73 = vector.multi_reduction <add>, %72, %cst_36 [1] : vector<2x8x1xf32> to vector<2x1xf32>
      %74 = vector.shape_cast %73 : vector<2x1xf32> to vector<2x1x1xf32>
      %cst_37 = arith.constant dense<0.000000e+00> : vector<1x1xf32>
      %75 = vector.multi_reduction <add>, %74, %cst_37 [0] : vector<2x1x1xf32> to vector<1x1xf32>
      %76 = vector.shape_cast %75 : vector<1x1xf32> to vector<1x1x1xf32>
      %77 = vector.extract %76[0, 0, 0] : f32 from vector<1x1x1xf32>
      %cst_38 = arith.constant 5.000000e-01 : f32
      %78 = arith.mulf %77, %cst_38 : f32
      %c1_i32 = arith.constant 1 : i32
      %79 = arith.addi %arg7, %c1_i32 : i32
      scf.yield %79, %52, %70, %78 : i32, vector<2x8x1xf32>, vector<2x1x16xf32>, f32
    }
    %21 = vector.broadcast %20#1 : vector<2x8x1xf32> to vector<2x8x16xf32>
    %22 = vector.broadcast %20#2 : vector<2x1x16xf32> to vector<2x8x16xf32>
    %23 = arith.addf %21, %22 : vector<2x8x16xf32>
    %24 = arith.subf %23, %14 : vector<2x8x16xf32>
    %cst_17 = arith.constant 1.000000e+00 : f32
    %25 = vector.broadcast %cst_17 : f32 to vector<2x8x16xf32>
    %26 = arith.mulf %24, %25 : vector<2x8x16xf32>
    %27 = math.exp %26 : vector<2x8x16xf32>
    %c0_18 = arith.constant 0 : index
    %c0_19 = arith.constant 0 : index
    %c0_20 = arith.constant 0 : index
    %28 = vector.load %arg3[%c0_18, %c0_19, %c0_20] : memref<2x8x16xf32, #tpu.memory_space<vmem>>, vector<2x8x16xf32>
    tpu.vector_store %arg3[%c0_18, %c0_19, %c0_20], %27 {strides = array<i32>} : memref<2x8x16xf32, #tpu.memory_space<vmem>>, vector<2x8x16xf32>,
    %29 = arith.mulf %27, %14 : vector<2x8x16xf32>
    "tpu.trace_start"() <{level = 10 : i32, message = "bij,bjo->bio"}> : () -> ()
    %cst_21 = arith.constant dense<0.000000e+00> : vector<2x8x1xf32>
    %30 = tpu.matmul %29, %16, %cst_21 {dimension_numbers = #tpu.dot_dimension_numbers<[2], [1], [1], [2], [0, 0, 0, 1, 1, 2], [0], [0]>} : vector<2x8x16xf32>, vector<2x16x1xf32>, vector<2x8x1xf32> -> vector<2x8x1xf32>
    "tpu.trace_stop"() : () -> ()
    %cst_22 = arith.constant dense<0.000000e+00> : vector<2x1xf32>
    %31 = vector.multi_reduction <add>, %30, %cst_22 [1] : vector<2x8x1xf32> to vector<2x1xf32>
    %32 = vector.shape_cast %31 : vector<2x1xf32> to vector<2x1x1xf32>
    %c0_23 = arith.constant 0 : index
    %c0_24 = arith.constant 0 : index
    %c0_25 = arith.constant 0 : index
    %33 = vector.load %arg2[%c0_23, %c0_24, %c0_25] : memref<2x1x1xf32, #tpu.memory_space<vmem>>, vector<2x1x1xf32>
    tpu.vector_store %arg2[%c0_23, %c0_24, %c0_25], %32 {strides = array<i32>} : memref<2x1x1xf32, #tpu.memory_space<vmem>>, vector<2x1x1xf32>,
    tpu.wait_dma2 semaphore(%arg6 : memref<!tpu.dma_semaphore, #tpu.memory_space<semaphore_mem>>) src(%arg5 : memref<2x8x16xf32, #tpu.memory_space<vmem>>) dst(%arg4 : memref<2x8x16xf32, #tpu.memory_space<any>>)
    return
  }
}

</mosaic_0001>

<llo_original>
// kernel: tpu_custom_call.1
$region0: #{tpu_custom_call.1}
  #allocation0 [shape = 'u32[]', space=smem, size = 0x4, offset = 0x4, fixed_abs, tag = 'smem constant byte address 0x4 - core index']
  #allocation1 [shape = 'u32[144,128]{1,0:T(1,128)}', space=vmem, size = 0x12000, scoped, tag = 'internal scratch']
  #allocation2 [shape = 'f32[2,8,16]{2,1,0:T(8,128)}', space=vmem, size = 0x2000, scoped, tag = 'scratch operand']
  #allocation3 [shape = 's32[1]{0}', space=sflag, size = 0x4, scoped, tag = 'scratch operand']
  #allocation6 [shape = 's32[]', space=sflag, size = 0x4, offset = 0, fixed_abs, tag = 'sflag constant byte address 0x0 - dummy sync flag']
  #allocation7 [shape = 's32[]', space=sflag, size = 0x4, offset = 0, fixed_abs, tag = 'sflag constant byte address 0x0 - dummy sync flag']
  #allocation8 [shape = 'u32[]', space=smem, size = 0x4, offset = 0x44, fixed_abs, tag = 'smem constant byte address 0x44 - assertion arg 0']
  #allocation9 [shape = 'u32[]', space=smem, size = 0x4, offset = 0x48, fixed_abs, tag = 'smem constant byte address 0x48 - assertion arg 1']
  %s0 = inlined_call_operand.vmem [shape: f32[2,8,8], index: 0, kind: input, shape index: {}]
  %s1 = inlined_call_operand.vmem [shape: f32[2,16,8], index: 1, kind: input, shape index: {}]
  %s2 = inlined_call_operand.vmem [shape: f32[2,1,1], index: 2, kind: output, shape index: {0}]
  %s3 = inlined_call_operand.hbm [shape: f32[2,8,16], index: 3, kind: output, shape index: {1}]
  %s4 = inlined_call_operand.hbm [shape: f32[2,8,16], index: 4, kind: output, shape index: {2}]
  %5 = xla_tuple %s2, %s3, %s4
  %s6 = sld [smem:[#allocation0]]
  $region37: #{tpu_custom_call.1} parent=0
    _
  %s8 = ssub.s32 1, %s6
  %s9 = scalar_select 0, %s8, %s6
  $region1: #{tpu_custom_call.1} parent=0
    #allocation4 [shape = 'u8[8192]{0}', space=vmem, size = 0x2000, scoped, tag = 'output window, operand 1, single buffered']
    #allocation5 [shape = 's32[1]{0}', space=sflag, size = 0x4, scoped, tag = 'scoped memory for tpu_custom_call.1']
    %10 = vsyncpa [#allocation5], 0
    // Predicated region
    $region2: #{tpu_custom_call.1} parent=1 // pred_check
      _
    $region3: #{tpu_custom_call.1} parent=1 // pred_check_branch
      %12 = sbr.rel (0) target = $region5
    $region4: #{tpu_custom_call.1} parent=1 // pred_region
      _
    $region5: #{tpu_custom_call.1} parent=1 // pred_fallthru
      _
    // Predicated region
    $region6: #{tpu_custom_call.1} parent=1 // pred_check
      _
    $region7: #{tpu_custom_call.1} parent=1 // pred_check_branch
      %14 = sbr.rel (0) target = $region9
    $region8: #{tpu_custom_call.1} parent=1 // pred_region
      _
    $region9: #{tpu_custom_call.1} parent=1 // pred_fallthru
      _
    %v15 = vld [vmem:[%s0] sm:$0xff]
    %v16 = vld [vmem:[%s0 + $0x8] sm:$0xff]
    %v17 = vld [vmem:[%s1] sm:$0xff]
    %v18 = vld [vmem:[%s1 + $0x8] sm:$0xff]
    %v19 = vld [vmem:[%s1 + $0x10] sm:$0xff]
    %v20 = vld [vmem:[%s1 + $0x18] sm:$0xff]
    %v21 = vmul.f32 %v15, %v15
    %v22 = vmul.f32 %v16, %v16
    %vm23 = vcmask 64512
    %v24 = vsel %vm23, %v21, 0.0
    %25 = vadd.xlane.f32.xlu0 %v24
    %v26 = vpop.xlane.xlu0 %25
    %v27 = vsel %vm23, %v22, 0.0
    %28 = vadd.xlane.f32.xlu0 %v27
    %v29 = vpop.xlane.xlu0 %28
    %v30 = vmul.f32 %v17, %v17
    %v31 = vmul.f32 %v18, %v18
    %v32 = vmul.f32 %v19, %v19
    %v33 = vmul.f32 %v20, %v20
    %v35 = vsel %vm23, 1.0, 0
    %v38 = vsel %vm23, %v30, 0
    %v41 = vsel %vm23, %v31, 0
    %43 = vmatprep.subr.mxu0 0.0
    %44 = vmatpush1.xpose.msra.mxu0 0.0
    %45 = vmatprep.subr.mxu0 0.0
    %46 = vmatpush1.xpose.msra.mxu0 0.0
    %47 = vmatprep.subr.mxu0 0.0
    %48 = vmatpush1.xpose.msra.mxu0 0.0
    %49 = vmatprep.subr.mxu0 0.0
    %50 = vmatpush1.xpose.msra.mxu0 0.0
    %51 = vmatprep.subr.mxu0 0.0
    %52 = vmatpush1.xpose.msra.mxu0 0.0
    %53 = vmatprep.subr.mxu0 0.0
    %54 = vmatpush1.xpose.msra.mxu0 0.0
    %55 = vmatprep.subr.mxu0 0.0
    %56 = vmatpush1.xpose.msra.mxu0 0.0
    %57 = vmatprep.subr.mxu0 0.0
    %58 = vmatpush1.xpose.msra.mxu0 0.0
    %59 = vmatprep.subr.mxu0 0.0
    %60 = vmatpush1.xpose.msra.mxu0 0.0
    %61 = vmatprep.subr.mxu0 0.0
    %62 = vmatpush1.xpose.msra.mxu0 0.0
    %63 = vmatprep.subr.mxu0 0.0
    %64 = vmatpush1.xpose.msra.mxu0 0.0
    %65 = vmatprep.subr.mxu0 0.0
    %66 = vmatpush1.xpose.msra.mxu0 0.0
    %67 = vmatprep.subr.mxu0 0.0
    %68 = vmatpush1.xpose.msra.mxu0 0.0
    %69 = vmatprep.subr.mxu0 0.0
    %70 = vmatpush1.xpose.msra.mxu0 0.0
    %71 = vmatprep.subr.mxu0 0.0
    %72 = vmatpush1.xpose.msra.mxu0 %v41
    %73 = vmatprep.subr.mxu0 0.0
    %74 = vmatpush1.xpose.msra.mxu0 %v38
    %75 = vmatprep.subr.mxu0 0.0
    %76 = vmatpush2.xpose.msra.mxu0 0.0
    %77 = vmatprep.subr.mxu0 0.0
    %78 = vmatpush2.xpose.msra.mxu0 0.0
    %79 = vmatprep.subr.mxu0 0.0
    %80 = vmatpush2.xpose.msra.mxu0 0.0
    %81 = vmatprep.subr.mxu0 0.0
    %82 = vmatpush2.xpose.msra.mxu0 0.0
    %83 = vmatprep.subr.mxu0 0.0
    %84 = vmatpush2.xpose.msra.mxu0 0.0
    %85 = vmatprep.subr.mxu0 0.0
    %86 = vmatpush2.xpose.msra.mxu0 0.0
    %87 = vmatprep.subr.mxu0 0.0
    %88 = vmatpush2.xpose.msra.mxu0 0.0
    %89 = vmatprep.subr.mxu0 0.0
    %90 = vmatpush2.xpose.msra.mxu0 0.0
    %91 = vmatprep.subr.mxu0 0.0
    %92 = vmatpush2.xpose.msra.mxu0 0.0
    %93 = vmatprep.subr.mxu0 0.0
    %94 = vmatpush2.xpose.msra.mxu0 0.0
    %95 = vmatprep.subr.mxu0 0.0
    %96 = vmatpush2.xpose.msra.mxu0 0.0
    %97 = vmatprep.subr.mxu0 0.0
    %98 = vmatpush2.xpose.msra.mxu0 0.0
    %99 = vmatprep.subr.mxu0 0.0
    %100 = vmatpush2.xpose.msra.mxu0 0.0
    %101 = vmatprep.subr.mxu0 0.0
    %102 = vmatpush2.xpose.msra.mxu0 0.0
    %103 = vmatprep.subr.mxu0 0.0
    %104 = vmatpush2.xpose.msra.mxu0 0.0
    %105 = vmatprep.subr.mxu0 0.0
    %106 = vmatpush2.xpose.msra.mxu0 0.0
    %107 = vmatprep.mubr.f32.mxu0 0.0
    %108 = vmatmul.mubr.f32.gmra.mxu0 %v35
    %v109 = vpop.f32.mrf.mxu0
    %v110 = vadd.f32 0.0, %v109
    %v111 = vpop.f32.mrf.mxu0
    %112 = vdwg.mxu0
    %v114 = vsel %vm23, %v32, 0
    %v117 = vsel %vm23, %v33, 0
    %119 = vmatprep.subr.mxu0 0.0
    %120 = vmatpush1.xpose.msra.mxu0 0.0
    %121 = vmatprep.subr.mxu0 0.0
    %122 = vmatpush1.xpose.msra.mxu0 0.0
    %123 = vmatprep.subr.mxu0 0.0
    %124 = vmatpush1.xpose.msra.mxu0 0.0
    %125 = vmatprep.subr.mxu0 0.0
    %126 = vmatpush1.xpose.msra.mxu0 0.0
    %127 = vmatprep.subr.mxu0 0.0
    %128 = vmatpush1.xpose.msra.mxu0 0.0
    %129 = vmatprep.subr.mxu0 0.0
    %130 = vmatpush1.xpose.msra.mxu0 0.0
    %131 = vmatprep.subr.mxu0 0.0
    %132 = vmatpush1.xpose.msra.mxu0 0.0
    %133 = vmatprep.subr.mxu0 0.0
    %134 = vmatpush1.xpose.msra.mxu0 0.0
    %135 = vmatprep.subr.mxu0 0.0
    %136 = vmatpush1.xpose.msra.mxu0 0.0
    %137 = vmatprep.subr.mxu0 0.0
    %138 = vmatpush1.xpose.msra.mxu0 0.0
    %139 = vmatprep.subr.mxu0 0.0
    %140 = vmatpush1.xpose.msra.mxu0 0.0
    %141 = vmatprep.subr.mxu0 0.0
    %142 = vmatpush1.xpose.msra.mxu0 0.0
    %143 = vmatprep.subr.mxu0 0.0
    %144 = vmatpush1.xpose.msra.mxu0 0.0
    %145 = vmatprep.subr.mxu0 0.0
    %146 = vmatpush1.xpose.msra.mxu0 0.0
    %147 = vmatprep.subr.mxu0 0.0
    %148 = vmatpush1.xpose.msra.mxu0 %v117
    %149 = vmatprep.subr.mxu0 0.0
    %150 = vmatpush1.xpose.msra.mxu0 %v114
    %151 = vmatprep.subr.mxu0 0.0
    %152 = vmatpush2.xpose.msra.mxu0 0.0
    %153 = vmatprep.subr.mxu0 0.0
    %154 = vmatpush2.xpose.msra.mxu0 0.0
    %155 = vmatprep.subr.mxu0 0.0
    %156 = vmatpush2.xpose.msra.mxu0 0.0
    %157 = vmatprep.subr.mxu0 0.0
    %158 = vmatpush2.xpose.msra.mxu0 0.0
    %159 = vmatprep.subr.mxu0 0.0
    %160 = vmatpush2.xpose.msra.mxu0 0.0
    %161 = vmatprep.subr.mxu0 0.0
    %162 = vmatpush2.xpose.msra.mxu0 0.0
    %163 = vmatprep.subr.mxu0 0.0
    %164 = vmatpush2.xpose.msra.mxu0 0.0
    %165 = vmatprep.subr.mxu0 0.0
    %166 = vmatpush2.xpose.msra.mxu0 0.0
    %167 = vmatprep.subr.mxu0 0.0
    %168 = vmatpush2.xpose.msra.mxu0 0.0
    %169 = vmatprep.subr.mxu0 0.0
    %170 = vmatpush2.xpose.msra.mxu0 0.0
    %171 = vmatprep.subr.mxu0 0.0
    %172 = vmatpush2.xpose.msra.mxu0 0.0
    %173 = vmatprep.subr.mxu0 0.0
    %174 = vmatpush2.xpose.msra.mxu0 0.0
    %175 = vmatprep.subr.mxu0 0.0
    %176 = vmatpush2.xpose.msra.mxu0 0.0
    %177 = vmatprep.subr.mxu0 0.0
    %178 = vmatpush2.xpose.msra.mxu0 0.0
    %179 = vmatprep.subr.mxu0 0.0
    %180 = vmatpush2.xpose.msra.mxu0 0.0
    %181 = vmatprep.subr.mxu0 0.0
    %182 = vmatpush2.xpose.msra.mxu0 0.0
    %183 = vmatprep.mubr.f32.mxu0 0.0
    %184 = vmatmul.mubr.f32.gmra.mxu0 %v35
    %v185 = vpop.f32.mrf.mxu0
    %v186 = vadd.f32 0.0, %v185
    %v187 = vpop.f32.mrf.mxu0
    %188 = vdwg.mxu0
    %v190 = vsel %vm23, %v15, 0
    %v193 = vsel %vm23, %v17, 0
    %v196 = vsel %vm23, %v18, 0
    %198 = vmatprep.subr.mxu0 0.0
    %199 = vmatpush1.xpose.msra.mxu0 0.0
    %200 = vmatprep.subr.mxu0 0.0
    %201 = vmatpush1.xpose.msra.mxu0 0.0
    %202 = vmatprep.subr.mxu0 0.0
    %203 = vmatpush1.xpose.msra.mxu0 0.0
    %204 = vmatprep.subr.mxu0 0.0
    %205 = vmatpush1.xpose.msra.mxu0 0.0
    %206 = vmatprep.subr.mxu0 0.0
    %207 = vmatpush1.xpose.msra.mxu0 0.0
    %208 = vmatprep.subr.mxu0 0.0
    %209 = vmatpush1.xpose.msra.mxu0 0.0
    %210 = vmatprep.subr.mxu0 0.0
    %211 = vmatpush1.xpose.msra.mxu0 0.0
    %212 = vmatprep.subr.mxu0 0.0
    %213 = vmatpush1.xpose.msra.mxu0 0.0
    %214 = vmatprep.subr.mxu0 0.0
    %215 = vmatpush1.xpose.msra.mxu0 0.0
    %216 = vmatprep.subr.mxu0 0.0
    %217 = vmatpush1.xpose.msra.mxu0 0.0
    %218 = vmatprep.subr.mxu0 0.0
    %219 = vmatpush1.xpose.msra.mxu0 0.0
    %220 = vmatprep.subr.mxu0 0.0
    %221 = vmatpush1.xpose.msra.mxu0 0.0
    %222 = vmatprep.subr.mxu0 0.0
    %223 = vmatpush1.xpose.msra.mxu0 0.0
    %224 = vmatprep.subr.mxu0 0.0
    %225 = vmatpush1.xpose.msra.mxu0 0.0
    %226 = vmatprep.subr.mxu0 0.0
    %227 = vmatpush1.xpose.msra.mxu0 %v196
    %228 = vmatprep.subr.mxu0 0.0
    %229 = vmatpush1.xpose.msra.mxu0 %v193
    %230 = vmatprep.subr.mxu0 0.0
    %231 = vmatpush2.xpose.msra.mxu0 0.0
    %232 = vmatprep.subr.mxu0 0.0
    %233 = vmatpush2.xpose.msra.mxu0 0.0
    %234 = vmatprep.subr.mxu0 0.0
    %235 = vmatpush2.xpose.msra.mxu0 0.0
    %236 = vmatprep.subr.mxu0 0.0
    %237 = vmatpush2.xpose.msra.mxu0 0.0
    %238 = vmatprep.subr.mxu0 0.0
    %239 = vmatpush2.xpose.msra.mxu0 0.0
    %240 = vmatprep.subr.mxu0 0.0
    %241 = vmatpush2.xpose.msra.mxu0 0.0
    %242 = vmatprep.subr.mxu0 0.0
    %243 = vmatpush2.xpose.msra.mxu0 0.0
    %244 = vmatprep.subr.mxu0 0.0
    %245 = vmatpush2.xpose.msra.mxu0 0.0
    %246 = vmatprep.subr.mxu0 0.0
    %247 = vmatpush2.xpose.msra.mxu0 0.0
    %248 = vmatprep.subr.mxu0 0.0
    %249 = vmatpush2.xpose.msra.mxu0 0.0
    %250 = vmatprep.subr.mxu0 0.0
    %251 = vmatpush2.xpose.msra.mxu0 0.0
    %252 = vmatprep.subr.mxu0 0.0
    %253 = vmatpush2.xpose.msra.mxu0 0.0
    %254 = vmatprep.subr.mxu0 0.0
    %255 = vmatpush2.xpose.msra.mxu0 0.0
    %256 = vmatprep.subr.mxu0 0.0
    %257 = vmatpush2.xpose.msra.mxu0 0.0
    %258 = vmatprep.subr.mxu0 0.0
    %259 = vmatpush2.xpose.msra.mxu0 0.0
    %260 = vmatprep.subr.mxu0 0.0
    %261 = vmatpush2.xpose.msra.mxu0 0.0
    %262 = vmatprep.mubr.f32.mxu0 0.0
    %263 = vmatmul.mubr.f32.gmra.mxu0 %v190
    %v264 = vpop.f32.mrf.mxu0
    %v265 = vadd.f32 0.0, %v264
    %v266 = vpop.f32.mrf.mxu0
    %267 = vdwg.mxu0
    %v269 = vsel %vm23, %v16, 0
    %v272 = vsel %vm23, %v19, 0
    %v275 = vsel %vm23, %v20, 0
    %277 = vmatprep.subr.mxu0 0.0
    %278 = vmatpush1.xpose.msra.mxu0 0.0
    %279 = vmatprep.subr.mxu0 0.0
    %280 = vmatpush1.xpose.msra.mxu0 0.0
    %281 = vmatprep.subr.mxu0 0.0
    %282 = vmatpush1.xpose.msra.mxu0 0.0
    %283 = vmatprep.subr.mxu0 0.0
    %284 = vmatpush1.xpose.msra.mxu0 0.0
    %285 = vmatprep.subr.mxu0 0.0
    %286 = vmatpush1.xpose.msra.mxu0 0.0
    %287 = vmatprep.subr.mxu0 0.0
    %288 = vmatpush1.xpose.msra.mxu0 0.0
    %289 = vmatprep.subr.mxu0 0.0
    %290 = vmatpush1.xpose.msra.mxu0 0.0
    %291 = vmatprep.subr.mxu0 0.0
    %292 = vmatpush1.xpose.msra.mxu0 0.0
    %293 = vmatprep.subr.mxu0 0.0
    %294 = vmatpush1.xpose.msra.mxu0 0.0
    %295 = vmatprep.subr.mxu0 0.0
    %296 = vmatpush1.xpose.msra.mxu0 0.0
    %297 = vmatprep.subr.mxu0 0.0
    %298 = vmatpush1.xpose.msra.mxu0 0.0
    %299 = vmatprep.subr.mxu0 0.0
    %300 = vmatpush1.xpose.msra.mxu0 0.0
    %301 = vmatprep.subr.mxu0 0.0
    %302 = vmatpush1.xpose.msra.mxu0 0.0
    %303 = vmatprep.subr.mxu0 0.0
    %304 = vmatpush1.xpose.msra.mxu0 0.0
    %305 = vmatprep.subr.mxu0 0.0
    %306 = vmatpush1.xpose.msra.mxu0 %v275
    %307 = vmatprep.subr.mxu0 0.0
    %308 = vmatpush1.xpose.msra.mxu0 %v272
    %309 = vmatprep.subr.mxu0 0.0
    %310 = vmatpush2.xpose.msra.mxu0 0.0
    %311 = vmatprep.subr.mxu0 0.0
    %312 = vmatpush2.xpose.msra.mxu0 0.0
    %313 = vmatprep.subr.mxu0 0.0
    %314 = vmatpush2.xpose.msra.mxu0 0.0
    %315 = vmatprep.subr.mxu0 0.0
    %316 = vmatpush2.xpose.msra.mxu0 0.0
    %317 = vmatprep.subr.mxu0 0.0
    %318 = vmatpush2.xpose.msra.mxu0 0.0
    %319 = vmatprep.subr.mxu0 0.0
    %320 = vmatpush2.xpose.msra.mxu0 0.0
    %321 = vmatprep.subr.mxu0 0.0
    %322 = vmatpush2.xpose.msra.mxu0 0.0
    %323 = vmatprep.subr.mxu0 0.0
    %324 = vmatpush2.xpose.msra.mxu0 0.0
    %325 = vmatprep.subr.mxu0 0.0
    %326 = vmatpush2.xpose.msra.mxu0 0.0
    %327 = vmatprep.subr.mxu0 0.0
    %328 = vmatpush2.xpose.msra.mxu0 0.0
    %329 = vmatprep.subr.mxu0 0.0
    %330 = vmatpush2.xpose.msra.mxu0 0.0
    %331 = vmatprep.subr.mxu0 0.0
    %332 = vmatpush2.xpose.msra.mxu0 0.0
    %333 = vmatprep.subr.mxu0 0.0
    %334 = vmatpush2.xpose.msra.mxu0 0.0
    %335 = vmatprep.subr.mxu0 0.0
    %336 = vmatpush2.xpose.msra.mxu0 0.0
    %337 = vmatprep.subr.mxu0 0.0
    %338 = vmatpush2.xpose.msra.mxu0 0.0
    %339 = vmatprep.subr.mxu0 0.0
    %340 = vmatpush2.xpose.msra.mxu0 0.0
    %341 = vmatprep.mubr.f32.mxu0 0.0
    %342 = vmatmul.mubr.f32.gmra.mxu0 %v269
    %v343 = vpop.f32.mrf.mxu0
    %v344 = vadd.f32 0.0, %v343
    %v345 = vpop.f32.mrf.mxu0
    %346 = vdwg.mxu0
    %v347 = vmul.f32 %v265, 2.0
    %v348 = vmul.f32 %v344, 2.0
    %v349 = vsub.f32 %v26, %v347
    %v350 = vsub.f32 %v29, %v348
    %v351 = vlaneseq
    %v352 = vshrl.u32 %v351, 7
    %v353 = vsub.s32 0, %v352
    %v354 = vrot.slane %v110, %v353
    %v355 = vlaneseq
    %v356 = vshrl.u32 %v355, 7
    %v357 = vsub.s32 0, %v356
    %v358 = vrot.slane %v186, %v357
    %v359 = vadd.f32 %v349, %v354
    %v360 = vadd.f32 %v350, %v358
    %vm361 = vcmask 130048
    %362 = vst.msk [vmem:[#allocation2] sm:$0xff] %vm361, %v359
    %363 = vst.msk [vmem:[#allocation2 + $0x8] sm:$0xff] %vm361, %v360
    // Predicated region
    $region10: #{tpu_custom_call.1} parent=1 // pred_check
      _
    $region11: #{tpu_custom_call.1} parent=1 // pred_check_branch
      %365 = sbr.rel target = $region13
    $region12: #{tpu_custom_call.1} parent=1 // pred_region
      %366 = sst [smem:[#allocation8]] [#allocation7]
      %367 = sst [smem:[#allocation9]] [#allocation6]
    $region13: #{tpu_custom_call.1} parent=1 // pred_fallthru
      _
    %369 = shalt.err (0)
    %s371 = sshll.u32 [#allocation2], 4
    %s372 = int_to_ptr.vmem [resolvable:$true] %s371
    %374 = dma.vmem_to_hbm [thread:$0]  %s372, 256, %s4, [#allocation3]
    // While loop
    $region14: #{tpu_custom_call.1} parent=1 // loop_pre_header
      _
    $region15: #{tpu_custom_call.1} parent=1 // loop_header
      %s376 = sphi 0, %s784
      %v377 = vphi 0.0, %v576
      %v378 = vphi 0.0, %v577
      %v379 = vphi 0.0, %v760
      %v380 = vphi 0.0, %v761
      %s381 = sphi inf, %s783
      %p382 = scmp.lt.s32.totalorder %s376, 100
      %p383 = scmp.ge.f32.partialorder %s381, 0.1
      %p384 = pnand %p382, %p383
      %p385 = pneg %p384
    $region16: #{tpu_custom_call.1} parent=1 // loop_header_branch
      %387 = sbr.rel (%p384) target = $region20
    $region17: #{tpu_custom_call.1} parent=1 // loop_body
      %389 = vset.pattern.permute.xlu0 0
      %390 = vperm.xlu0 %389, %v377
      %v391 = vpop.permute.xlu0 %390
      %394 = vset.pattern.permute.xlu0 0
      %395 = vperm.xlu0 %394, %v378
      %v396 = vpop.permute.xlu0 %395
      %v398 = vlaneseq
      %v399 = vshrl.u32 %v398, 7
      %v400 = vsub.s32 0, %v399
      %v401 = vrot.slane %v379, %v400
      %v402 = vlaneseq
      %v403 = vshrl.u32 %v402, 7
      %v404 = vsub.s32 0, %v403
      %v405 = vrot.slane %v380, %v404
      %v406 = vadd.f32 %v391, %v401
      %v407 = vadd.f32 %v396, %v405
      %v408 = vsub.f32 %v406, %v359
      %v409 = vsub.f32 %v407, %v360
      %v410 = vsel %vm361, %v408, -inf
      %411 = vmax.xlane.f32.xlu0 %v410
      %v412 = vpop.xlane.xlu0 %411
      %v413 = vsel %vm361, %v409, -inf
      %414 = vmax.xlane.f32.xlu0 %v413
      %v415 = vpop.xlane.xlu0 %414
      %v416 = vsub.f32 %v408, %v412
      %v417 = vsub.f32 %v409, %v415
      %v418 = vmul.f32 %v416, 1.442695
      %v419 = vpow.pop %v418
      %v420 = vmul.f32 %v417, 1.442695
      %v421 = vpow.pop %v420
      %v423 = vsel %vm361, %v419, 0
      %425 = vmatprep.subr.mxu0 0.0
      %426 = vmatpush1.msra.mxu0 0.0
      %427 = vmatprep.subr.mxu0 0.0
      %428 = vmatpush1.msra.mxu0 0.0
      %429 = vmatprep.subr.mxu0 0.0
      %430 = vmatpush1.msra.mxu0 0.0
      %431 = vmatprep.subr.mxu0 0.0
      %432 = vmatpush1.msra.mxu0 0.0
      %433 = vmatprep.subr.mxu0 0.0
      %434 = vmatpush1.msra.mxu0 0.0
      %435 = vmatprep.subr.mxu0 0.0
      %436 = vmatpush1.msra.mxu0 0.0
      %437 = vmatprep.subr.mxu0 0.0
      %438 = vmatpush1.msra.mxu0 0.0
      %439 = vmatprep.subr.mxu0 0.0
      %440 = vmatpush1.msra.mxu0 0.0
      %441 = vmatprep.subr.mxu0 0.0
      %442 = vmatpush1.msra.mxu0 0.0
      %443 = vmatprep.subr.mxu0 0.0
      %444 = vmatpush1.msra.mxu0 0.0
      %445 = vmatprep.subr.mxu0 0.0
      %446 = vmatpush1.msra.mxu0 0.0
      %447 = vmatprep.subr.mxu0 0.0
      %448 = vmatpush1.msra.mxu0 0.0
      %449 = vmatprep.subr.mxu0 0.0
      %450 = vmatpush1.msra.mxu0 0.0
      %451 = vmatprep.subr.mxu0 0.0
      %452 = vmatpush1.msra.mxu0 0.0
      %453 = vmatprep.subr.mxu0 0.0
      %454 = vmatpush1.msra.mxu0 1.0
      %455 = vmatprep.subr.mxu0 0.0
      %456 = vmatpush1.msra.mxu0 1.0
      %457 = vmatprep.subr.mxu0 0.0
      %458 = vmatpush2.msra.mxu0 0.0
      %459 = vmatprep.subr.mxu0 0.0
      %460 = vmatpush2.msra.mxu0 0.0
      %461 = vmatprep.subr.mxu0 0.0
      %462 = vmatpush2.msra.mxu0 0.0
      %463 = vmatprep.subr.mxu0 0.0
      %464 = vmatpush2.msra.mxu0 0.0
      %465 = vmatprep.subr.mxu0 0.0
      %466 = vmatpush2.msra.mxu0 0.0
      %467 = vmatprep.subr.mxu0 0.0
      %468 = vmatpush2.msra.mxu0 0.0
      %469 = vmatprep.subr.mxu0 0.0
      %470 = vmatpush2.msra.mxu0 0.0
      %471 = vmatprep.subr.mxu0 0.0
      %472 = vmatpush2.msra.mxu0 0.0
      %473 = vmatprep.subr.mxu0 0.0
      %474 = vmatpush2.msra.mxu0 0.0
      %475 = vmatprep.subr.mxu0 0.0
      %476 = vmatpush2.msra.mxu0 0.0
      %477 = vmatprep.subr.mxu0 0.0
      %478 = vmatpush2.msra.mxu0 0.0
      %479 = vmatprep.subr.mxu0 0.0
      %480 = vmatpush2.msra.mxu0 0.0
      %481 = vmatprep.subr.mxu0 0.0
      %482 = vmatpush2.msra.mxu0 0.0
      %483 = vmatprep.subr.mxu0 0.0
      %484 = vmatpush2.msra.mxu0 0.0
      %485 = vmatprep.subr.mxu0 0.0
      %486 = vmatpush2.msra.mxu0 0.0
      %487 = vmatprep.subr.mxu0 0.0
      %488 = vmatpush2.msra.mxu0 0.0
      %489 = vmatprep.mubr.f32.mxu0 0.0
      %490 = vmatmul.mubr.f32.gmra.mxu0 %v423
      %v491 = vpop.f32.mrf.mxu0
      %v492 = vadd.f32 0.0, %v491
      %v493 = vpop.f32.mrf.mxu0
      %494 = vdwg.mxu0
      %v496 = vsel %vm361, %v421, 0
      %498 = vmatprep.subr.mxu0 0.0
      %499 = vmatpush1.msra.mxu0 0.0
      %500 = vmatprep.subr.mxu0 0.0
      %501 = vmatpush1.msra.mxu0 0.0
      %502 = vmatprep.subr.mxu0 0.0
      %503 = vmatpush1.msra.mxu0 0.0
      %504 = vmatprep.subr.mxu0 0.0
      %505 = vmatpush1.msra.mxu0 0.0
      %506 = vmatprep.subr.mxu0 0.0
      %507 = vmatpush1.msra.mxu0 0.0
      %508 = vmatprep.subr.mxu0 0.0
      %509 = vmatpush1.msra.mxu0 0.0
      %510 = vmatprep.subr.mxu0 0.0
      %511 = vmatpush1.msra.mxu0 0.0
      %512 = vmatprep.subr.mxu0 0.0
      %513 = vmatpush1.msra.mxu0 0.0
      %514 = vmatprep.subr.mxu0 0.0
      %515 = vmatpush1.msra.mxu0 0.0
      %516 = vmatprep.subr.mxu0 0.0
      %517 = vmatpush1.msra.mxu0 0.0
      %518 = vmatprep.subr.mxu0 0.0
      %519 = vmatpush1.msra.mxu0 0.0
      %520 = vmatprep.subr.mxu0 0.0
      %521 = vmatpush1.msra.mxu0 0.0
      %522 = vmatprep.subr.mxu0 0.0
      %523 = vmatpush1.msra.mxu0 0.0
      %524 = vmatprep.subr.mxu0 0.0
      %525 = vmatpush1.msra.mxu0 0.0
      %526 = vmatprep.subr.mxu0 0.0
      %527 = vmatpush1.msra.mxu0 1.0
      %528 = vmatprep.subr.mxu0 0.0
      %529 = vmatpush1.msra.mxu0 1.0
      %530 = vmatprep.subr.mxu0 0.0
      %531 = vmatpush2.msra.mxu0 0.0
      %532 = vmatprep.subr.mxu0 0.0
      %533 = vmatpush2.msra.mxu0 0.0
      %534 = vmatprep.subr.mxu0 0.0
      %535 = vmatpush2.msra.mxu0 0.0
      %536 = vmatprep.subr.mxu0 0.0
      %537 = vmatpush2.msra.mxu0 0.0
      %538 = vmatprep.subr.mxu0 0.0
      %539 = vmatpush2.msra.mxu0 0.0
      %540 = vmatprep.subr.mxu0 0.0
      %541 = vmatpush2.msra.mxu0 0.0
      %542 = vmatprep.subr.mxu0 0.0
      %543 = vmatpush2.msra.mxu0 0.0
      %544 = vmatprep.subr.mxu0 0.0
      %545 = vmatpush2.msra.mxu0 0.0
      %546 = vmatprep.subr.mxu0 0.0
      %547 = vmatpush2.msra.mxu0 0.0
      %548 = vmatprep.subr.mxu0 0.0
      %549 = vmatpush2.msra.mxu0 0.0
      %550 = vmatprep.subr.mxu0 0.0
      %551 = vmatpush2.msra.mxu0 0.0
      %552 = vmatprep.subr.mxu0 0.0
      %553 = vmatpush2.msra.mxu0 0.0
      %554 = vmatprep.subr.mxu0 0.0
      %555 = vmatpush2.msra.mxu0 0.0
      %556 = vmatprep.subr.mxu0 0.0
      %557 = vmatpush2.msra.mxu0 0.0
      %558 = vmatprep.subr.mxu0 0.0
      %559 = vmatpush2.msra.mxu0 0.0
      %560 = vmatprep.subr.mxu0 0.0
      %561 = vmatpush2.msra.mxu0 0.0
      %562 = vmatprep.mubr.f32.mxu0 0.0
      %563 = vmatmul.mubr.f32.gmra.mxu0 %v496
      %v564 = vpop.f32.mrf.mxu0
      %v565 = vadd.f32 0.0, %v564
      %v566 = vpop.f32.mrf.mxu0
      %567 = vdwg.mxu0
      %v568 = vlog2.pop %v492
      %v569 = vmul.f32 %v568, 0.6931472
      %v570 = vlog2.pop %v565
      %v571 = vmul.f32 %v570, 0.6931472
      %v572 = vadd.f32 %v569, %v412
      %v573 = vadd.f32 %v571, %v415
      %v574 = vsub.f32 -2.0794415, %v572
      %v575 = vsub.f32 -2.0794415, %v573
      %v576 = vadd.f32 %v574, %v377
      %v577 = vadd.f32 %v575, %v378
      %v578 = vsub.f32 %v576, %v377
      %v579 = vsub.f32 %v577, %v378
      %581 = vset.pattern.permute.xlu0 0
      %582 = vperm.xlu0 %581, %v578
      %v583 = vpop.permute.xlu0 %582
      %586 = vset.pattern.permute.xlu0 0
      %587 = vperm.xlu0 %586, %v579
      %v588 = vpop.permute.xlu0 %587
      %v590 = vadd.f32 %v408, %v583
      %v591 = vadd.f32 %v409, %v588
      %v592 = vsel %vm361, %v590, -inf
      %v593 = vrot.slane %v592, 4
      %v594 = vmax.f32 %v592, %v593
      %v595 = vrot.slane %v594, 2
      %v596 = vmax.f32 %v594, %v595
      %v597 = vrot.slane %v596, 1
      %v598 = vmax.f32 %v596, %v597
      %v599 = vsel %vm361, %v591, -inf
      %v600 = vrot.slane %v599, 4
      %v601 = vmax.f32 %v599, %v600
      %v602 = vrot.slane %v601, 2
      %v603 = vmax.f32 %v601, %v602
      %v604 = vrot.slane %v603, 1
      %v605 = vmax.f32 %v603, %v604
      %v606 = vsub.f32 %v590, %v598
      %v607 = vsub.f32 %v591, %v605
      %v608 = vmul.f32 %v606, 1.442695
      %v609 = vpow.pop %v608
      %v610 = vmul.f32 %v607, 1.442695
      %v611 = vpow.pop %v610
      %612 = vmatprep.subr.mxu0 0.0
      %613 = vmatpush1.msra.mxu0 0.0
      %614 = vmatprep.subr.mxu0 0.0
      %615 = vmatpush1.msra.mxu0 0.0
      %616 = vmatprep.subr.mxu0 0.0
      %617 = vmatpush1.msra.mxu0 0.0
      %618 = vmatprep.subr.mxu0 0.0
      %619 = vmatpush1.msra.mxu0 0.0
      %620 = vmatprep.subr.mxu0 0.0
      %621 = vmatpush1.msra.mxu0 0.0
      %622 = vmatprep.subr.mxu0 0.0
      %623 = vmatpush1.msra.mxu0 0.0
      %624 = vmatprep.subr.mxu0 0.0
      %625 = vmatpush1.msra.mxu0 0.0
      %626 = vmatprep.subr.mxu0 0.0
      %627 = vmatpush1.msra.mxu0 0.0
      %628 = vmatprep.subr.mxu0 0.0
      %629 = vmatpush1.msra.mxu0 0.0
      %630 = vmatprep.subr.mxu0 0.0
      %631 = vmatpush1.msra.mxu0 0.0
      %632 = vmatprep.subr.mxu0 0.0
      %633 = vmatpush1.msra.mxu0 0.0
      %634 = vmatprep.subr.mxu0 0.0
      %635 = vmatpush1.msra.mxu0 0.0
      %636 = vmatprep.subr.mxu0 0.0
      %637 = vmatpush1.msra.mxu0 0.0
      %638 = vmatprep.subr.mxu0 0.0
      %639 = vmatpush1.msra.mxu0 0.0
      %640 = vmatprep.subr.mxu0 0.0
      %641 = vmatpush1.msra.mxu0 0.0
      %642 = vmatprep.subr.mxu0 0.0
      %643 = vmatpush1.msra.mxu0 %v609
      %644 = vmatprep.subr.mxu0 0.0
      %645 = vmatpush2.msra.mxu0 0.0
      %646 = vmatprep.subr.mxu0 0.0
      %647 = vmatpush2.msra.mxu0 0.0
      %648 = vmatprep.subr.mxu0 0.0
      %649 = vmatpush2.msra.mxu0 0.0
      %650 = vmatprep.subr.mxu0 0.0
      %651 = vmatpush2.msra.mxu0 0.0
      %652 = vmatprep.subr.mxu0 0.0
      %653 = vmatpush2.msra.mxu0 0.0
      %654 = vmatprep.subr.mxu0 0.0
      %655 = vmatpush2.msra.mxu0 0.0
      %656 = vmatprep.subr.mxu0 0.0
      %657 = vmatpush2.msra.mxu0 0.0
      %658 = vmatprep.subr.mxu0 0.0
      %659 = vmatpush2.msra.mxu0 0.0
      %660 = vmatprep.subr.mxu0 0.0
      %661 = vmatpush2.msra.mxu0 0.0
      %662 = vmatprep.subr.mxu0 0.0
      %663 = vmatpush2.msra.mxu0 0.0
      %664 = vmatprep.subr.mxu0 0.0
      %665 = vmatpush2.msra.mxu0 0.0
      %666 = vmatprep.subr.mxu0 0.0
      %667 = vmatpush2.msra.mxu0 0.0
      %668 = vmatprep.subr.mxu0 0.0
      %669 = vmatpush2.msra.mxu0 0.0
      %670 = vmatprep.subr.mxu0 0.0
      %671 = vmatpush2.msra.mxu0 0.0
      %672 = vmatprep.subr.mxu0 0.0
      %673 = vmatpush2.msra.mxu0 0.0
      %674 = vmatprep.subr.mxu0 0.0
      %675 = vmatpush2.msra.mxu0 0.0
      %676 = vmatprep.mubr.f32.mxu0 0.0
      %677 = vmatmul.mubr.f32.gmra.mxu0 %v35
      %v678 = vpop.f32.mrf.mxu0
      %v679 = vadd.f32 0.0, %v678
      %v680 = vpop.f32.mrf.mxu0
      %681 = vdwg.mxu0
      %682 = vmatprep.subr.mxu0 0.0
      %683 = vmatpush1.msra.mxu0 0.0
      %684 = vmatprep.subr.mxu0 0.0
      %685 = vmatpush1.msra.mxu0 0.0
      %686 = vmatprep.subr.mxu0 0.0
      %687 = vmatpush1.msra.mxu0 0.0
      %688 = vmatprep.subr.mxu0 0.0
      %689 = vmatpush1.msra.mxu0 0.0
      %690 = vmatprep.subr.mxu0 0.0
      %691 = vmatpush1.msra.mxu0 0.0
      %692 = vmatprep.subr.mxu0 0.0
      %693 = vmatpush1.msra.mxu0 0.0
      %694 = vmatprep.subr.mxu0 0.0
      %695 = vmatpush1.msra.mxu0 0.0
      %696 = vmatprep.subr.mxu0 0.0
      %697 = vmatpush1.msra.mxu0 0.0
      %698 = vmatprep.subr.mxu0 0.0
      %699 = vmatpush1.msra.mxu0 0.0
      %700 = vmatprep.subr.mxu0 0.0
      %701 = vmatpush1.msra.mxu0 0.0
      %702 = vmatprep.subr.mxu0 0.0
      %703 = vmatpush1.msra.mxu0 0.0
      %704 = vmatprep.subr.mxu0 0.0
      %705 = vmatpush1.msra.mxu0 0.0
      %706 = vmatprep.subr.mxu0 0.0
      %707 = vmatpush1.msra.mxu0 0.0
      %708 = vmatprep.subr.mxu0 0.0
      %709 = vmatpush1.msra.mxu0 0.0
      %710 = vmatprep.subr.mxu0 0.0
      %711 = vmatpush1.msra.mxu0 0.0
      %712 = vmatprep.subr.mxu0 0.0
      %713 = vmatpush1.msra.mxu0 %v611
      %714 = vmatprep.subr.mxu0 0.0
      %715 = vmatpush2.msra.mxu0 0.0
      %716 = vmatprep.subr.mxu0 0.0
      %717 = vmatpush2.msra.mxu0 0.0
      %718 = vmatprep.subr.mxu0 0.0
      %719 = vmatpush2.msra.mxu0 0.0
      %720 = vmatprep.subr.mxu0 0.0
      %721 = vmatpush2.msra.mxu0 0.0
      %722 = vmatprep.subr.mxu0 0.0
      %723 = vmatpush2.msra.mxu0 0.0
      %724 = vmatprep.subr.mxu0 0.0
      %725 = vmatpush2.msra.mxu0 0.0
      %726 = vmatprep.subr.mxu0 0.0
      %727 = vmatpush2.msra.mxu0 0.0
      %728 = vmatprep.subr.mxu0 0.0
      %729 = vmatpush2.msra.mxu0 0.0
      %730 = vmatprep.subr.mxu0 0.0
      %731 = vmatpush2.msra.mxu0 0.0
      %732 = vmatprep.subr.mxu0 0.0
      %733 = vmatpush2.msra.mxu0 0.0
      %734 = vmatprep.subr.mxu0 0.0
      %735 = vmatpush2.msra.mxu0 0.0
      %736 = vmatprep.subr.mxu0 0.0
      %737 = vmatpush2.msra.mxu0 0.0
      %738 = vmatprep.subr.mxu0 0.0
      %739 = vmatpush2.msra.mxu0 0.0
      %740 = vmatprep.subr.mxu0 0.0
      %741 = vmatpush2.msra.mxu0 0.0
      %742 = vmatprep.subr.mxu0 0.0
      %743 = vmatpush2.msra.mxu0 0.0
      %744 = vmatprep.subr.mxu0 0.0
      %745 = vmatpush2.msra.mxu0 0.0
      %746 = vmatprep.mubr.f32.mxu0 0.0
      %747 = vmatmul.mubr.f32.gmra.mxu0 %v35
      %v748 = vpop.f32.mrf.mxu0
      %v749 = vadd.f32 0.0, %v748
      %v750 = vpop.f32.mrf.mxu0
      %751 = vdwg.mxu0
      %v752 = vlog2.pop %v679
      %v753 = vmul.f32 %v752, 0.6931472
      %v754 = vlog2.pop %v749
      %v755 = vmul.f32 %v754, 0.6931472
      %v756 = vadd.f32 %v753, %v598
      %v757 = vadd.f32 %v755, %v605
      %v758 = vsub.f32 -2.7725885, %v756
      %v759 = vsub.f32 -2.7725885, %v757
      %v760 = vadd.f32 %v758, %v379
      %v761 = vadd.f32 %v759, %v380
      %v762 = vand.u32 2147483647, %v578
      %v763 = vand.u32 2147483647, %v579
      %vm764 = vcmask 7168
      %v765 = vsel %vm764, %v762, 0.0
      %v766 = vrot.slane %v765, 4
      %v767 = vadd.f32 %v765, %v766
      %v768 = vrot.slane %v767, 2
      %v769 = vadd.f32 %v767, %v768
      %v770 = vrot.slane %v769, 1
      %v771 = vadd.f32 %v769, %v770
      %v772 = vsel %vm764, %v763, 0.0
      %v773 = vrot.slane %v772, 4
      %v774 = vadd.f32 %v772, %v773
      %v775 = vrot.slane %v774, 2
      %v776 = vadd.f32 %v774, %v775
      %v777 = vrot.slane %v776, 1
      %v778 = vadd.f32 %v776, %v777
      %v779 = vsel %vm764, %v771, 0.0
      %v780 = vsel %vm764, %v778, 0.0
      %v781 = vadd.f32 %v779, %v780
      %s782 = vtos %v781
      %s783 = smul.f32 %s782, 0.5
      %s784 = sadd.s32 %s376, 1
    $region18: #{tpu_custom_call.1} parent=1 // loop_footer
      _
    $region19: #{tpu_custom_call.1} parent=1 // loop_footer_branch
      %375 = sbr.rel target = $region15
    $region20: #{tpu_custom_call.1} parent=1 // loop_exit
      _
    %786 = vset.pattern.permute.xlu0 0
    %787 = vperm.xlu0 %786, %v377
    %v788 = vpop.permute.xlu0 %787
    %791 = vset.pattern.permute.xlu0 0
    %792 = vperm.xlu0 %791, %v378
    %v793 = vpop.permute.xlu0 %792
    %v795 = vlaneseq
    %v796 = vshrl.u32 %v795, 7
    %v797 = vsub.s32 0, %v796
    %v798 = vrot.slane %v379, %v797
    %v799 = vlaneseq
    %v800 = vshrl.u32 %v799, 7
    %v801 = vsub.s32 0, %v800
    %v802 = vrot.slane %v380, %v801
    %v803 = vadd.f32 %v788, %v798
    %v804 = vadd.f32 %v793, %v802
    %v805 = vsub.f32 %v803, %v359
    %v806 = vsub.f32 %v804, %v360
    %v807 = vmul.f32 %v805, 1.442695
    %v808 = vpow.pop %v807
    %v809 = vmul.f32 %v806, 1.442695
    %v810 = vpow.pop %v809
    %811 = vst.msk [vmem:[#allocation4] sm:$0xff] %vm361, %v808
    %812 = vst.msk [vmem:[#allocation4 + $0x8] sm:$0xff] %vm361, %v810
    %v813 = vmul.f32 %v808, %v359
    %v814 = vmul.f32 %v810, %v360
    %v816 = vsel %vm361, %v813, 0
    %818 = vmatprep.subr.mxu0 0.0
    %819 = vmatpush1.msra.mxu0 0.0
    %820 = vmatprep.subr.mxu0 0.0
    %821 = vmatpush1.msra.mxu0 0.0
    %822 = vmatprep.subr.mxu0 0.0
    %823 = vmatpush1.msra.mxu0 0.0
    %824 = vmatprep.subr.mxu0 0.0
    %825 = vmatpush1.msra.mxu0 0.0
    %826 = vmatprep.subr.mxu0 0.0
    %827 = vmatpush1.msra.mxu0 0.0
    %828 = vmatprep.subr.mxu0 0.0
    %829 = vmatpush1.msra.mxu0 0.0
    %830 = vmatprep.subr.mxu0 0.0
    %831 = vmatpush1.msra.mxu0 0.0
    %832 = vmatprep.subr.mxu0 0.0
    %833 = vmatpush1.msra.mxu0 0.0
    %834 = vmatprep.subr.mxu0 0.0
    %835 = vmatpush1.msra.mxu0 0.0
    %836 = vmatprep.subr.mxu0 0.0
    %837 = vmatpush1.msra.mxu0 0.0
    %838 = vmatprep.subr.mxu0 0.0
    %839 = vmatpush1.msra.mxu0 0.0
    %840 = vmatprep.subr.mxu0 0.0
    %841 = vmatpush1.msra.mxu0 0.0
    %842 = vmatprep.subr.mxu0 0.0
    %843 = vmatpush1.msra.mxu0 0.0
    %844 = vmatprep.subr.mxu0 0.0
    %845 = vmatpush1.msra.mxu0 0.0
    %846 = vmatprep.subr.mxu0 0.0
    %847 = vmatpush1.msra.mxu0 1.0
    %848 = vmatprep.subr.mxu0 0.0
    %849 = vmatpush1.msra.mxu0 1.0
    %850 = vmatprep.subr.mxu0 0.0
    %851 = vmatpush2.msra.mxu0 0.0
    %852 = vmatprep.subr.mxu0 0.0
    %853 = vmatpush2.msra.mxu0 0.0
    %854 = vmatprep.subr.mxu0 0.0
    %855 = vmatpush2.msra.mxu0 0.0
    %856 = vmatprep.subr.mxu0 0.0
    %857 = vmatpush2.msra.mxu0 0.0
    %858 = vmatprep.subr.mxu0 0.0
    %859 = vmatpush2.msra.mxu0 0.0
    %860 = vmatprep.subr.mxu0 0.0
    %861 = vmatpush2.msra.mxu0 0.0
    %862 = vmatprep.subr.mxu0 0.0
    %863 = vmatpush2.msra.mxu0 0.0
    %864 = vmatprep.subr.mxu0 0.0
    %865 = vmatpush2.msra.mxu0 0.0
    %866 = vmatprep.subr.mxu0 0.0
    %867 = vmatpush2.msra.mxu0 0.0
    %868 = vmatprep.subr.mxu0 0.0
    %869 = vmatpush2.msra.mxu0 0.0
    %870 = vmatprep.subr.mxu0 0.0
    %871 = vmatpush2.msra.mxu0 0.0
    %872 = vmatprep.subr.mxu0 0.0
    %873 = vmatpush2.msra.mxu0 0.0
    %874 = vmatprep.subr.mxu0 0.0
    %875 = vmatpush2.msra.mxu0 0.0
    %876 = vmatprep.subr.mxu0 0.0
    %877 = vmatpush2.msra.mxu0 0.0
    %878 = vmatprep.subr.mxu0 0.0
    %879 = vmatpush2.msra.mxu0 0.0
    %880 = vmatprep.subr.mxu0 0.0
    %881 = vmatpush2.msra.mxu0 0.0
    %882 = vmatprep.mubr.f32.mxu0 0.0
    %883 = vmatmul.mubr.f32.gmra.mxu0 %v816
    %v884 = vpop.f32.mrf.mxu0
    %v885 = vadd.f32 0.0, %v884
    %v886 = vpop.f32.mrf.mxu0
    %887 = vdwg.mxu0
    %v889 = vsel %vm361, %v814, 0
    %891 = vmatprep.subr.mxu0 0.0
    %892 = vmatpush1.msra.mxu0 0.0
    %893 = vmatprep.subr.mxu0 0.0
    %894 = vmatpush1.msra.mxu0 0.0
    %895 = vmatprep.subr.mxu0 0.0
    %896 = vmatpush1.msra.mxu0 0.0
    %897 = vmatprep.subr.mxu0 0.0
    %898 = vmatpush1.msra.mxu0 0.0
    %899 = vmatprep.subr.mxu0 0.0
    %900 = vmatpush1.msra.mxu0 0.0
    %901 = vmatprep.subr.mxu0 0.0
    %902 = vmatpush1.msra.mxu0 0.0
    %903 = vmatprep.subr.mxu0 0.0
    %904 = vmatpush1.msra.mxu0 0.0
    %905 = vmatprep.subr.mxu0 0.0
    %906 = vmatpush1.msra.mxu0 0.0
    %907 = vmatprep.subr.mxu0 0.0
    %908 = vmatpush1.msra.mxu0 0.0
    %909 = vmatprep.subr.mxu0 0.0
    %910 = vmatpush1.msra.mxu0 0.0
    %911 = vmatprep.subr.mxu0 0.0
    %912 = vmatpush1.msra.mxu0 0.0
    %913 = vmatprep.subr.mxu0 0.0
    %914 = vmatpush1.msra.mxu0 0.0
    %915 = vmatprep.subr.mxu0 0.0
    %916 = vmatpush1.msra.mxu0 0.0
    %917 = vmatprep.subr.mxu0 0.0
    %918 = vmatpush1.msra.mxu0 0.0
    %919 = vmatprep.subr.mxu0 0.0
    %920 = vmatpush1.msra.mxu0 1.0
    %921 = vmatprep.subr.mxu0 0.0
    %922 = vmatpush1.msra.mxu0 1.0
    %923 = vmatprep.subr.mxu0 0.0
    %924 = vmatpush2.msra.mxu0 0.0
    %925 = vmatprep.subr.mxu0 0.0
    %926 = vmatpush2.msra.mxu0 0.0
    %927 = vmatprep.subr.mxu0 0.0
    %928 = vmatpush2.msra.mxu0 0.0
    %929 = vmatprep.subr.mxu0 0.0
    %930 = vmatpush2.msra.mxu0 0.0
    %931 = vmatprep.subr.mxu0 0.0
    %932 = vmatpush2.msra.mxu0 0.0
    %933 = vmatprep.subr.mxu0 0.0
    %934 = vmatpush2.msra.mxu0 0.0
    %935 = vmatprep.subr.mxu0 0.0
    %936 = vmatpush2.msra.mxu0 0.0
    %937 = vmatprep.subr.mxu0 0.0
    %938 = vmatpush2.msra.mxu0 0.0
    %939 = vmatprep.subr.mxu0 0.0
    %940 = vmatpush2.msra.mxu0 0.0
    %941 = vmatprep.subr.mxu0 0.0
    %942 = vmatpush2.msra.mxu0 0.0
    %943 = vmatprep.subr.mxu0 0.0
    %944 = vmatpush2.msra.mxu0 0.0
    %945 = vmatprep.subr.mxu0 0.0
    %946 = vmatpush2.msra.mxu0 0.0
    %947 = vmatprep.subr.mxu0 0.0
    %948 = vmatpush2.msra.mxu0 0.0
    %949 = vmatprep.subr.mxu0 0.0
    %950 = vmatpush2.msra.mxu0 0.0
    %951 = vmatprep.subr.mxu0 0.0
    %952 = vmatpush2.msra.mxu0 0.0
    %953 = vmatprep.subr.mxu0 0.0
    %954 = vmatpush2.msra.mxu0 0.0
    %955 = vmatprep.mubr.f32.mxu0 0.0
    %956 = vmatmul.mubr.f32.gmra.mxu0 %v889
    %v957 = vpop.f32.mrf.mxu0
    %v958 = vadd.f32 0.0, %v957
    %v959 = vpop.f32.mrf.mxu0
    %960 = vdwg.mxu0
    %vm961 = vcmask 7168
    %v962 = vsel %vm961, %v885, 0.0
    %v963 = vrot.slane %v962, 4
    %v964 = vadd.f32 %v962, %v963
    %v965 = vrot.slane %v964, 2
    %v966 = vadd.f32 %v964, %v965
    %v967 = vrot.slane %v966, 1
    %v968 = vadd.f32 %v966, %v967
    %v969 = vsel %vm961, %v958, 0.0
    %v970 = vrot.slane %v969, 4
    %v971 = vadd.f32 %v969, %v970
    %v972 = vrot.slane %v971, 2
    %v973 = vadd.f32 %v971, %v972
    %v974 = vrot.slane %v973, 1
    %v975 = vadd.f32 %v973, %v974
    %vm976 = vcmask 0
    %977 = vst.msk [vmem:[%s2] sm:$0x1] %vm976, %v968
    %978 = vst.msk [vmem:[%s2 + $0x1] sm:$0x1] %vm976, %v975
    %s979 = smul.u32 2, 8
    %s980 = smul.u32 %s979, 1
    %s981 = sshll.u32 %s980, 4
    %982 = dma.done [#allocation3], %s981
    // Predicated region
    $region21: #{tpu_custom_call.1} parent=1 // pred_check
      _
    $region22: #{tpu_custom_call.1} parent=1 // pred_check_branch
      %984 = sbr.rel (0) target = $region24
    $region23: #{tpu_custom_call.1} parent=1 // pred_region
      _
    $region24: #{tpu_custom_call.1} parent=1 // pred_fallthru
      _
    // Predicated region
    $region25: #{tpu_custom_call.1} parent=1 // pred_check
      _
    $region26: #{tpu_custom_call.1} parent=1 // pred_check_branch
      %986 = sbr.rel (0) target = $region28
    $region27: #{tpu_custom_call.1} parent=1 // pred_region
      %s988 = ssub.s32 256, 256
      %989 = vsyncadd [#allocation5], %s988
      %s990 = sshll.u32 [#allocation4], 4
      %s991 = int_to_ptr.vmem [resolvable:$true] %s990
      %996 = dma.vmem_to_hbm [thread:$0]  %s991, 256, %s3, [#allocation5], 128, 128, 8
    $region28: #{tpu_custom_call.1} parent=1 // pred_fallthru
      _
    // Predicated region
    $region29: #{tpu_custom_call.1} parent=1 // pred_check
      _
    $region30: #{tpu_custom_call.1} parent=1 // pred_check_branch
      %998 = sbr.rel (0) target = $region32
    $region31: #{tpu_custom_call.1} parent=1 // pred_region
      _
    $region32: #{tpu_custom_call.1} parent=1 // pred_fallthru
      _
    // Predicated region
    $region33: #{tpu_custom_call.1} parent=1 // pred_check
      _
    $region34: #{tpu_custom_call.1} parent=1 // pred_check_branch
      %1000 = sbr.rel (0) target = $region36
    $region35: #{tpu_custom_call.1} parent=1 // pred_region
      %1001 = dma.done [#allocation5], 256
    $region36: #{tpu_custom_call.1} parent=1 // pred_fallthru
      _
    %1002 = vsyncpa [#allocation5], 1
  %1003 = vsyncmov [#allocation3]
  %s1004 = vpop.sfrf %1003
  %p1005 = scmp.eq.s32.totalorder %s1004, 0
  %p1006 = pneg %p1005
  %1008 = shalt.err (%p1006)

</llo_original>
